<compile_context>
chip_gen: v7x
topology: tpu7x:2x2x1
jax: 0.10.0
libtpu: 0.0.40
codegen_flags: <defaults>
</compile_context>

<pallas_src>
import numpy as np
import jax
import jax.numpy as jnp
from jax.experimental import pallas as pl
from jax.experimental.pallas import tpu as pltpu


def _make_kernel(W, K, HW):
    pad = K // 2
    KK = K * K

    def kernel(x_ref, w_ref, b_ref, mask_ref, o_ref):
        # x_ref   : (N*Cin,  HW)          flattened NCHW input (batch in sublanes)
        # w_ref   : (K*K, N*Cout, N*Cin)  per-tap BN-scale-folded, batch-block-diag
        # b_ref   : (N*Cout, HW)          folded BN shift, pre-broadcast over lanes
        # mask_ref: (K*K, HW)             combined (vertical & horizontal) validity
        # o_ref   : (N*Cout, HW)          output (reshapes freely back to NCHW)
        x2d = x_ref[...]                  # (N*Cin, HW)
        w_all = w_ref[...]                # (KK, N*Cout, N*Cin)
        masks = mask_ref[...]             # (KK, HW)

        # Start from the folded BN shift -> no epilogue bias add needed.
        acc = b_ref[...]                  # (N*Cout, HW) f32

        # One tap = lane-rotate of the flattened input by the flat offset
        # d = dh*W + dw, with wrapped/out-of-image lanes zeroed by the
        # combined mask (mask also guarantees no cross-batch-row reads are
        # ever used, since valid positions satisfy 0 <= p+d < HW).
        for t in range(KK):
            dh = t // K - pad
            dw = t % K - pad
            d = dh * W + dw                                   # flat lane shift
            if d == 0:
                tap = x2d
            else:
                # jnp.roll semantics: result[p] = x[(p + d) mod HW]
                tap = pltpu.roll(x2d, shift=(-d) % HW, axis=1)
            tap = tap * masks[t:t + 1, :]                     # zero invalid lanes
            acc = acc + jnp.dot(w_all[t], tap,
                                preferred_element_type=jnp.float32)

        o_ref[...] = jnp.maximum(acc, 0.0).astype(o_ref.dtype)   # ReLU

    return kernel


def smolnet_late_layer(x_nchw, conv_w, conv_b, bn_gamma, bn_beta,
                       bn_mean, bn_var, eps=1e-5):
    """Forward pass of SMoLnetLateLayer.

    x_nchw : (N, Cin, H, W) float32  ->  (N, Cout, H, W) float32
    conv_w : (Cout, Cin, K, K) (PyTorch OIHW layout)
    """
    N, Cin, H, W = x_nchw.shape
    Cout, _, K, _ = conv_w.shape
    pad = K // 2
    HW = H * W
    KK = K * K
    NCin, NCout = N * Cin, N * Cout

    # ---- trace-time parameter folding (tiny; no feature-map HBM passes) ----
    # Eval-mode BN:  y = s * (conv(x, w) + b - mean) + beta,  s = gamma/sqrt(var+eps)
    s = (bn_gamma / jnp.sqrt(bn_var + eps)).astype(jnp.float32)        # (Cout,)
    w_taps = conv_w.astype(jnp.float32) * s[:, None, None, None]       # (Cout,Cin,K,K)
    # OIHW -> (tap = kh*K+kw, Cout, Cin)
    w_taps = jnp.transpose(w_taps, (2, 3, 0, 1)).reshape(KK, Cout, Cin)
    # Block-diagonal over the batch so one matmul serves all batch rows:
    # w_blk[t, n*Cout+o, m*Cin+i] = (n==m) * w_taps[t, o, i]
    eye = jnp.eye(N, dtype=jnp.float32)
    w_blk = (eye[None, :, None, :, None] *
             w_taps[:, None, :, None, :]).reshape(KK, NCout, NCin)

    # Folded BN shift (incl. conv bias), pre-broadcast over lanes.
    shift_c = ((conv_b - bn_mean) * s + bn_beta).astype(jnp.float32)   # (Cout,)
    b_full = jnp.broadcast_to(jnp.tile(shift_c, (N,))[:, None], (NCout, HW))

    # Combined per-tap validity masks over flattened spatial positions
    # (compile-time constants; encode both 0<=h+dh<H and 0<=w+dw<W).
    h_idx = np.arange(HW, dtype=np.int64) // W
    w_idx = np.arange(HW, dtype=np.int64) % W
    mrows = []
    for t in range(KK):
        dh, dw = t // K - pad, t % K - pad
        ok = ((h_idx + dh >= 0) & (h_idx + dh < H) &
              (w_idx + dw >= 0) & (w_idx + dw < W))
        mrows.append(ok.astype(np.float32))
    masks = jnp.asarray(np.stack(mrows, axis=0))                       # (KK, HW)

    # Free reshape: NCHW is contiguous -> (N*Cin, H*W), batch folded in sublanes.
    x_flat = x_nchw.astype(jnp.float32).reshape(NCin, HW)

    kernel = _make_kernel(W, K, HW)
    out_flat = pl.pallas_call(
        kernel,
        out_shape=jax.ShapeDtypeStruct((NCout, HW), jnp.float32),
        grid_spec=pltpu.PrefetchScalarGridSpec(
            num_scalar_prefetch=0,
            grid=(1,),                                 # single step: whole layer
            in_specs=[
                pl.BlockSpec((NCin, HW), lambda i: (0, 0)),
                pl.BlockSpec((KK, NCout, NCin), lambda i: (0, 0, 0)),
                pl.BlockSpec((NCout, HW), lambda i: (0, 0)),
                pl.BlockSpec((KK, HW), lambda i: (0, 0)),
            ],
            out_specs=pl.BlockSpec((NCout, HW), lambda i: (0, 0)),
        ),
        compiler_params=pltpu.CompilerParams(
            dimension_semantics=("arbitrary",),
        ),
    )(x_flat, w_blk, b_full, masks)

    # Free reshape back to NCHW.
    return out_flat.reshape(N, Cout, H, W)


def _reference(x_nchw, conv_w, conv_b, bn_gamma, bn_beta, bn_mean, bn_var,
               eps=1e-5):
    """Pure-JAX reference (eval-mode BN), NCHW in/out."""
    y = jax.lax.conv_general_dilated(
        x_nchw, conv_w,
        window_strides=(1, 1), padding="SAME",
        dimension_numbers=("NCHW", "OIHW", "NCHW"),
    ) + conv_b.reshape(1, -1, 1, 1)
    s = (bn_gamma / jnp.sqrt(bn_var + eps)).reshape(1, -1, 1, 1)
    y = (y - bn_mean.reshape(1, -1, 1, 1)) * s + bn_beta.reshape(1, -1, 1, 1)
    return jnp.maximum(y, 0.0)


if __name__ == "__main__":
    # Small shapes consistent with the module: N=2, Cin=4, H=W=16, Cout=8, K=3.
    N, Cin, H, W, Cout, K = 2, 4, 16, 16, 8, 3

    key = jax.random.PRNGKey(0)
    k1, k2, k3, k4, k5, k6, k7 = jax.random.split(key, 7)

    x = jax.random.normal(k1, (N, Cin, H, W), dtype=jnp.float32)

    # Deterministic synthetic parameters (no checkpoint load).
    conv_w = 0.1 * jax.random.normal(k2, (Cout, Cin, K, K), dtype=jnp.float32)
    conv_b = 0.1 * jax.random.normal(k3, (Cout,), dtype=jnp.float32)
    bn_gamma = 1.0 + 0.1 * jax.random.normal(k4, (Cout,), dtype=jnp.float32)
    bn_beta = 0.1 * jax.random.normal(k5, (Cout,), dtype=jnp.float32)
    bn_mean = 0.1 * jax.random.normal(k6, (Cout,), dtype=jnp.float32)
    bn_var = jnp.abs(1.0 + 0.1 * jax.random.normal(k7, (Cout,), dtype=jnp.float32))

    out = smolnet_late_layer(x, conv_w, conv_b, bn_gamma, bn_beta,
                             bn_mean, bn_var)
    out = jax.block_until_ready(out)

    ref = _reference(x, conv_w, conv_b, bn_gamma, bn_beta, bn_mean, bn_var)
    assert out.shape == (N, Cout, H, W)
    np.testing.assert_allclose(np.asarray(out), np.asarray(ref),
                               rtol=1e-4, atol=1e-4)

    print("KERNEL_OK")
</pallas_src>

<mosaic_0001>
module attributes {stable_mosaic.version = 11 : i64} {
  func.func @kernel(%arg0: i32, %arg1: memref<8x256xf32, #tpu.memory_space<vmem>>, %arg2: memref<9x16x8xf32, #tpu.memory_space<vmem>>, %arg3: memref<16x256xf32, #tpu.memory_space<vmem>>, %arg4: memref<9x256xf32, #tpu.memory_space<vmem>>, %arg5: memref<16x256xf32, #tpu.memory_space<vmem>>) attributes {dimension_semantics = [#tpu.dimension_semantics<arbitrary>], iteration_bounds = array<i64: 1>, scalar_prefetch = 0 : i64, scratch_operands = 0 : i64, tpu.core_type = #tpu.core_type<tc>, window_params = [{pipeline_mode = #tpu.pipeline_mode<synchronous>, transform_indices = @transform_0, window_bounds = array<i64: 8, 256>}, {pipeline_mode = #tpu.pipeline_mode<synchronous>, transform_indices = @transform_1, window_bounds = array<i64: 9, 16, 8>}, {pipeline_mode = #tpu.pipeline_mode<synchronous>, transform_indices = @transform_2, window_bounds = array<i64: 16, 256>}, {pipeline_mode = #tpu.pipeline_mode<synchronous>, transform_indices = @transform_3, window_bounds = array<i64: 9, 256>}, {pipeline_mode = #tpu.pipeline_mode<synchronous>, transform_indices = @transform_4, window_bounds = array<i64: 16, 256>}]} {
    %c0 = arith.constant 0 : index
    %c0_0 = arith.constant 0 : index
    %0 = vector.load %arg1[%c0, %c0_0] : memref<8x256xf32, #tpu.memory_space<vmem>>, vector<8x256xf32>
    %c0_1 = arith.constant 0 : index
    %c0_2 = arith.constant 0 : index
    %c0_3 = arith.constant 0 : index
    %1 = vector.load %arg2[%c0_1, %c0_2, %c0_3] : memref<9x16x8xf32, #tpu.memory_space<vmem>>, vector<9x16x8xf32>
    %c0_4 = arith.constant 0 : index
    %c0_5 = arith.constant 0 : index
    %2 = vector.load %arg4[%c0_4, %c0_5] : memref<9x256xf32, #tpu.memory_space<vmem>>, vector<9x256xf32>
    %c0_6 = arith.constant 0 : index
    %c0_7 = arith.constant 0 : index
    %3 = vector.load %arg3[%c0_6, %c0_7] : memref<16x256xf32, #tpu.memory_space<vmem>>, vector<16x256xf32>
    %c17_i32 = arith.constant 17 : i32
    %4 = tpu.dynamic_rotate %0 by %c17_i32 dim 1 : vector<8x256xf32>, i32 -> vector<8x256xf32>
    %5 = vector.extract_strided_slice %2 {offsets = [0, 0], sizes = [1, 256], strides = [1, 1]} : vector<9x256xf32> to vector<1x256xf32>
    %6 = vector.broadcast %5 : vector<1x256xf32> to vector<8x256xf32>
    %7 = arith.mulf %4, %6 : vector<8x256xf32>
    %8 = vector.extract_strided_slice %1 {offsets = [0, 0, 0], sizes = [1, 16, 8], strides = [1, 1, 1]} : vector<9x16x8xf32> to vector<1x16x8xf32>
    %9 = vector.shape_cast %8 : vector<1x16x8xf32> to vector<16x8xf32>
    %cst = arith.constant dense<0.000000e+00> : vector<16x256xf32>
    %10 = tpu.matmul %9, %7, %cst {dimension_numbers = #tpu.dot_dimension_numbers<[1], [0], [0], [1], [0, 0, 1, 1], [], []>} : vector<16x8xf32>, vector<8x256xf32>, vector<16x256xf32> -> vector<16x256xf32>
    %11 = arith.addf %3, %10 : vector<16x256xf32>
    %c16_i32 = arith.constant 16 : i32
    %12 = tpu.dynamic_rotate %0 by %c16_i32 dim 1 : vector<8x256xf32>, i32 -> vector<8x256xf32>
    %13 = vector.extract_strided_slice %2 {offsets = [1, 0], sizes = [1, 256], strides = [1, 1]} : vector<9x256xf32> to vector<1x256xf32>
    %14 = vector.broadcast %13 : vector<1x256xf32> to vector<8x256xf32>
    %15 = arith.mulf %12, %14 : vector<8x256xf32>
    %16 = vector.extract_strided_slice %1 {offsets = [1, 0, 0], sizes = [1, 16, 8], strides = [1, 1, 1]} : vector<9x16x8xf32> to vector<1x16x8xf32>
    %17 = vector.shape_cast %16 : vector<1x16x8xf32> to vector<16x8xf32>
    %cst_8 = arith.constant dense<0.000000e+00> : vector<16x256xf32>
    %18 = tpu.matmul %17, %15, %cst_8 {dimension_numbers = #tpu.dot_dimension_numbers<[1], [0], [0], [1], [0, 0, 1, 1], [], []>} : vector<16x8xf32>, vector<8x256xf32>, vector<16x256xf32> -> vector<16x256xf32>
    %19 = arith.addf %11, %18 : vector<16x256xf32>
    %c15_i32 = arith.constant 15 : i32
    %20 = tpu.dynamic_rotate %0 by %c15_i32 dim 1 : vector<8x256xf32>, i32 -> vector<8x256xf32>
    %21 = vector.extract_strided_slice %2 {offsets = [2, 0], sizes = [1, 256], strides = [1, 1]} : vector<9x256xf32> to vector<1x256xf32>
    %22 = vector.broadcast %21 : vector<1x256xf32> to vector<8x256xf32>
    %23 = arith.mulf %20, %22 : vector<8x256xf32>
    %24 = vector.extract_strided_slice %1 {offsets = [2, 0, 0], sizes = [1, 16, 8], strides = [1, 1, 1]} : vector<9x16x8xf32> to vector<1x16x8xf32>
    %25 = vector.shape_cast %24 : vector<1x16x8xf32> to vector<16x8xf32>
    %cst_9 = arith.constant dense<0.000000e+00> : vector<16x256xf32>
    %26 = tpu.matmul %25, %23, %cst_9 {dimension_numbers = #tpu.dot_dimension_numbers<[1], [0], [0], [1], [0, 0, 1, 1], [], []>} : vector<16x8xf32>, vector<8x256xf32>, vector<16x256xf32> -> vector<16x256xf32>
    %27 = arith.addf %19, %26 : vector<16x256xf32>
    %c1_i32 = arith.constant 1 : i32
    %28 = tpu.dynamic_rotate %0 by %c1_i32 dim 1 : vector<8x256xf32>, i32 -> vector<8x256xf32>
    %29 = vector.extract_strided_slice %2 {offsets = [3, 0], sizes = [1, 256], strides = [1, 1]} : vector<9x256xf32> to vector<1x256xf32>
    %30 = vector.broadcast %29 : vector<1x256xf32> to vector<8x256xf32>
    %31 = arith.mulf %28, %30 : vector<8x256xf32>
    %32 = vector.extract_strided_slice %1 {offsets = [3, 0, 0], sizes = [1, 16, 8], strides = [1, 1, 1]} : vector<9x16x8xf32> to vector<1x16x8xf32>
    %33 = vector.shape_cast %32 : vector<1x16x8xf32> to vector<16x8xf32>
    %cst_10 = arith.constant dense<0.000000e+00> : vector<16x256xf32>
    %34 = tpu.matmul %33, %31, %cst_10 {dimension_numbers = #tpu.dot_dimension_numbers<[1], [0], [0], [1], [0, 0, 1, 1], [], []>} : vector<16x8xf32>, vector<8x256xf32>, vector<16x256xf32> -> vector<16x256xf32>
    %35 = arith.addf %27, %34 : vector<16x256xf32>
    %36 = vector.extract_strided_slice %2 {offsets = [4, 0], sizes = [1, 256], strides = [1, 1]} : vector<9x256xf32> to vector<1x256xf32>
    %37 = vector.broadcast %36 : vector<1x256xf32> to vector<8x256xf32>
    %38 = arith.mulf %0, %37 : vector<8x256xf32>
    %39 = vector.extract_strided_slice %1 {offsets = [4, 0, 0], sizes = [1, 16, 8], strides = [1, 1, 1]} : vector<9x16x8xf32> to vector<1x16x8xf32>
    %40 = vector.shape_cast %39 : vector<1x16x8xf32> to vector<16x8xf32>
    %cst_11 = arith.constant dense<0.000000e+00> : vector<16x256xf32>
    %41 = tpu.matmul %40, %38, %cst_11 {dimension_numbers = #tpu.dot_dimension_numbers<[1], [0], [0], [1], [0, 0, 1, 1], [], []>} : vector<16x8xf32>, vector<8x256xf32>, vector<16x256xf32> -> vector<16x256xf32>
    %42 = arith.addf %35, %41 : vector<16x256xf32>
    %c255_i32 = arith.constant 255 : i32
    %43 = tpu.dynamic_rotate %0 by %c255_i32 dim 1 : vector<8x256xf32>, i32 -> vector<8x256xf32>
    %44 = vector.extract_strided_slice %2 {offsets = [5, 0], sizes = [1, 256], strides = [1, 1]} : vector<9x256xf32> to vector<1x256xf32>
    %45 = vector.broadcast %44 : vector<1x256xf32> to vector<8x256xf32>
    %46 = arith.mulf %43, %45 : vector<8x256xf32>
    %47 = vector.extract_strided_slice %1 {offsets = [5, 0, 0], sizes = [1, 16, 8], strides = [1, 1, 1]} : vector<9x16x8xf32> to vector<1x16x8xf32>
    %48 = vector.shape_cast %47 : vector<1x16x8xf32> to vector<16x8xf32>
    %cst_12 = arith.constant dense<0.000000e+00> : vector<16x256xf32>
    %49 = tpu.matmul %48, %46, %cst_12 {dimension_numbers = #tpu.dot_dimension_numbers<[1], [0], [0], [1], [0, 0, 1, 1], [], []>} : vector<16x8xf32>, vector<8x256xf32>, vector<16x256xf32> -> vector<16x256xf32>
    %50 = arith.addf %42, %49 : vector<16x256xf32>
    %c241_i32 = arith.constant 241 : i32
    %51 = tpu.dynamic_rotate %0 by %c241_i32 dim 1 : vector<8x256xf32>, i32 -> vector<8x256xf32>
    %52 = vector.extract_strided_slice %2 {offsets = [6, 0], sizes = [1, 256], strides = [1, 1]} : vector<9x256xf32> to vector<1x256xf32>
    %53 = vector.broadcast %52 : vector<1x256xf32> to vector<8x256xf32>
    %54 = arith.mulf %51, %53 : vector<8x256xf32>
    %55 = vector.extract_strided_slice %1 {offsets = [6, 0, 0], sizes = [1, 16, 8], strides = [1, 1, 1]} : vector<9x16x8xf32> to vector<1x16x8xf32>
    %56 = vector.shape_cast %55 : vector<1x16x8xf32> to vector<16x8xf32>
    %cst_13 = arith.constant dense<0.000000e+00> : vector<16x256xf32>
    %57 = tpu.matmul %56, %54, %cst_13 {dimension_numbers = #tpu.dot_dimension_numbers<[1], [0], [0], [1], [0, 0, 1, 1], [], []>} : vector<16x8xf32>, vector<8x256xf32>, vector<16x256xf32> -> vector<16x256xf32>
    %58 = arith.addf %50, %57 : vector<16x256xf32>
    %c240_i32 = arith.constant 240 : i32
    %59 = tpu.dynamic_rotate %0 by %c240_i32 dim 1 : vector<8x256xf32>, i32 -> vector<8x256xf32>
    %60 = vector.extract_strided_slice %2 {offsets = [7, 0], sizes = [1, 256], strides = [1, 1]} : vector<9x256xf32> to vector<1x256xf32>
    %61 = vector.broadcast %60 : vector<1x256xf32> to vector<8x256xf32>
    %62 = arith.mulf %59, %61 : vector<8x256xf32>
    %63 = vector.extract_strided_slice %1 {offsets = [7, 0, 0], sizes = [1, 16, 8], strides = [1, 1, 1]} : vector<9x16x8xf32> to vector<1x16x8xf32>
    %64 = vector.shape_cast %63 : vector<1x16x8xf32> to vector<16x8xf32>
    %cst_14 = arith.constant dense<0.000000e+00> : vector<16x256xf32>
    %65 = tpu.matmul %64, %62, %cst_14 {dimension_numbers = #tpu.dot_dimension_numbers<[1], [0], [0], [1], [0, 0, 1, 1], [], []>} : vector<16x8xf32>, vector<8x256xf32>, vector<16x256xf32> -> vector<16x256xf32>
    %66 = arith.addf %58, %65 : vector<16x256xf32>
    %c239_i32 = arith.constant 239 : i32
    %67 = tpu.dynamic_rotate %0 by %c239_i32 dim 1 : vector<8x256xf32>, i32 -> vector<8x256xf32>
    %68 = vector.extract_strided_slice %2 {offsets = [8, 0], sizes = [1, 256], strides = [1, 1]} : vector<9x256xf32> to vector<1x256xf32>
    %69 = vector.broadcast %68 : vector<1x256xf32> to vector<8x256xf32>
    %70 = arith.mulf %67, %69 : vector<8x256xf32>
    %71 = vector.extract_strided_slice %1 {offsets = [8, 0, 0], sizes = [1, 16, 8], strides = [1, 1, 1]} : vector<9x16x8xf32> to vector<1x16x8xf32>
    %72 = vector.shape_cast %71 : vector<1x16x8xf32> to vector<16x8xf32>
    %cst_15 = arith.constant dense<0.000000e+00> : vector<16x256xf32>
    %73 = tpu.matmul %72, %70, %cst_15 {dimension_numbers = #tpu.dot_dimension_numbers<[1], [0], [0], [1], [0, 0, 1, 1], [], []>} : vector<16x8xf32>, vector<8x256xf32>, vector<16x256xf32> -> vector<16x256xf32>
    %74 = arith.addf %66, %73 : vector<16x256xf32>
    %cst_16 = arith.constant 0.000000e+00 : f32
    %75 = vector.broadcast %cst_16 : f32 to vector<16x256xf32>
    %76 = arith.maximumf %74, %75 : vector<16x256xf32>
    %c0_17 = arith.constant 0 : index
    %c0_18 = arith.constant 0 : index
    %77 = vector.load %arg5[%c0_17, %c0_18] : memref<16x256xf32, #tpu.memory_space<vmem>>, vector<16x256xf32>
    tpu.vector_store %arg5[%c0_17, %c0_18], %76 {strides = array<i32>} : memref<16x256xf32, #tpu.memory_space<vmem>>, vector<16x256xf32>,
    return
  }
  func.func @transform_0(%arg0: i32) -> (i32, i32) {
    %c0_i32 = arith.constant 0 : i32
    %c0_i32_0 = arith.constant 0 : i32
    %c0_i32_1 = arith.constant 0 : i32
    return %c0_i32, %c0_i32_0 : i32, i32
  }
  func.func @transform_1(%arg0: i32) -> (i32, i32, i32) {
    %c0_i32 = arith.constant 0 : i32
    %c0_i32_0 = arith.constant 0 : i32
    %c0_i32_1 = arith.constant 0 : i32
    %c0_i32_2 = arith.constant 0 : i32
    return %c0_i32, %c0_i32_0, %c0_i32_1 : i32, i32, i32
  }
  func.func @transform_2(%arg0: i32) -> (i32, i32) {
    %c0_i32 = arith.constant 0 : i32
    %c0_i32_0 = arith.constant 0 : i32
    %c0_i32_1 = arith.constant 0 : i32
    return %c0_i32, %c0_i32_0 : i32, i32
  }
  func.func @transform_3(%arg0: i32) -> (i32, i32) {
    %c0_i32 = arith.constant 0 : i32
    %c0_i32_0 = arith.constant 0 : i32
    %c0_i32_1 = arith.constant 0 : i32
    return %c0_i32, %c0_i32_0 : i32, i32
  }
  func.func @transform_4(%arg0: i32) -> (i32, i32) {
    %c0_i32 = arith.constant 0 : i32
    %c0_i32_0 = arith.constant 0 : i32
    %c0_i32_1 = arith.constant 0 : i32
    return %c0_i32, %c0_i32_0 : i32, i32
  }
}

</mosaic_0001>

<llo_original>
// kernel: tpu_custom_call.1
$region0: #{tpu_custom_call.1}
  #allocation0 [shape = 'u32[]', space=smem, size = 0x4, offset = 0x4, fixed_abs, tag = 'smem constant byte address 0x4 - core index']
  #allocation1 [shape = 'u32[144,128]{1,0:T(1,128)}', space=vmem, size = 0x12000, scoped, tag = 'internal scratch']
  %s0 = inlined_call_operand.vmem [shape: f32[8,256], index: 0, kind: input, shape index: {}]
  %s1 = inlined_call_operand.vmem [shape: f32[9,16,8], index: 1, kind: input, shape index: {}]
  %s2 = inlined_call_operand.vmem [shape: f32[16,256], index: 2, kind: input, shape index: {}]
  %s3 = inlined_call_operand.vmem [shape: f32[9,256], index: 3, kind: input, shape index: {}]
  %s4 = inlined_call_operand.hbm [shape: f32[16,256], index: 4, kind: output, shape index: {}]
  %s5 = sld [smem:[#allocation0]]
  $region26: #{tpu_custom_call.1} parent=0
    _
  %s7 = ssub.s32 1, %s5
  %s8 = scalar_select 0, %s7, %s5
  $region1: #{tpu_custom_call.1} parent=0
    #allocation2 [shape = 'u8[16384]{0}', space=vmem, size = 0x4000, scoped, tag = 'output window, operand 0, single buffered']
    #allocation3 [shape = 's32[1]{0}', space=sflag, size = 0x4, scoped, tag = 'scoped memory for tpu_custom_call.1']
    %9 = vsyncpa [#allocation3], 0
    // Predicated region
    $region2: #{tpu_custom_call.1} parent=1 // pred_check
      _
    $region3: #{tpu_custom_call.1} parent=1 // pred_check_branch
      %11 = sbr.rel (0) target = $region5
    $region4: #{tpu_custom_call.1} parent=1 // pred_region
      _
    $region5: #{tpu_custom_call.1} parent=1 // pred_fallthru
      _
    // Predicated region
    $region6: #{tpu_custom_call.1} parent=1 // pred_check
      _
    $region7: #{tpu_custom_call.1} parent=1 // pred_check_branch
      %13 = sbr.rel (0) target = $region9
    $region8: #{tpu_custom_call.1} parent=1 // pred_region
      _
    $region9: #{tpu_custom_call.1} parent=1 // pred_fallthru
      _
    // Predicated region
    $region10: #{tpu_custom_call.1} parent=1 // pred_check
      _
    $region11: #{tpu_custom_call.1} parent=1 // pred_check_branch
      %15 = sbr.rel (0) target = $region13
    $region12: #{tpu_custom_call.1} parent=1 // pred_region
      _
    $region13: #{tpu_custom_call.1} parent=1 // pred_fallthru
      _
    // Predicated region
    $region14: #{tpu_custom_call.1} parent=1 // pred_check
      _
    $region15: #{tpu_custom_call.1} parent=1 // pred_check_branch
      %17 = sbr.rel (0) target = $region17
    $region16: #{tpu_custom_call.1} parent=1 // pred_region
      _
    $region17: #{tpu_custom_call.1} parent=1 // pred_fallthru
      _
    %v18 = vld [vmem:[%s0] sm:$0xff]
    %v19 = vld [vmem:[%s0 + $0x8] sm:$0xff]
    %v20 = vld [vmem:[%s1] sm:$0xff]
    %v21 = vld [vmem:[%s1 + $0x8] sm:$0xff]
    %v22 = vld [vmem:[%s1 + $0x10] sm:$0xff]
    %v23 = vld [vmem:[%s1 + $0x18] sm:$0xff]
    %v24 = vld [vmem:[%s1 + $0x20] sm:$0xff]
    %v25 = vld [vmem:[%s1 + $0x28] sm:$0xff]
    %v26 = vld [vmem:[%s1 + $0x30] sm:$0xff]
    %v27 = vld [vmem:[%s1 + $0x38] sm:$0xff]
    %v28 = vld [vmem:[%s1 + $0x40] sm:$0xff]
    %v29 = vld [vmem:[%s1 + $0x48] sm:$0xff]
    %v30 = vld [vmem:[%s1 + $0x50] sm:$0xff]
    %v31 = vld [vmem:[%s1 + $0x58] sm:$0xff]
    %v32 = vld [vmem:[%s1 + $0x60] sm:$0xff]
    %v33 = vld [vmem:[%s1 + $0x68] sm:$0xff]
    %v34 = vld [vmem:[%s1 + $0x70] sm:$0xff]
    %v35 = vld [vmem:[%s1 + $0x78] sm:$0xff]
    %v36 = vld [vmem:[%s1 + $0x80] sm:$0xff]
    %v37 = vld [vmem:[%s1 + $0x88] sm:$0xff]
    %v38 = vld [vmem:[%s3] sm:$0xff]
    %v39 = vld [vmem:[%s3 + $0x8] sm:$0xff]
    %v40 = vld [vmem:[%s3 + $0x10] sm:$0x1]
    %v41 = vld [vmem:[%s3 + $0x18] sm:$0x1]
    %v42 = vld [vmem:[%s2] sm:$0xff]
    %v43 = vld [vmem:[%s2 + $0x8] sm:$0xff]
    %v44 = vld [vmem:[%s2 + $0x10] sm:$0xff]
    %v45 = vld [vmem:[%s2 + $0x18] sm:$0xff]
    %46 = vrot.lane.b32.xlu0 %v18, 17
    %v47 = vpop.permute.xlu0 %46
    %48 = vrot.lane.b32.xlu0 %v19, 17
    %v49 = vpop.permute.xlu0 %48
    %v50 = vlaneseq
    %v51 = vand.u32 %v50, 127
    %vm52 = vcmp.lt.s32.totalorder %v51, 17
    %v53 = vsel %vm52, %v47, %v49
    %v54 = vsel %vm52, %v49, %v47
    %v55 = vlaneseq
    %v56 = vshrl.u32 %v55, 7
    %v57 = vsub.s32 0, %v56
    %v58 = vrot.slane %v38, %v57
    %v59 = vlaneseq
    %v60 = vshrl.u32 %v59, 7
    %v61 = vsub.s32 0, %v60
    %v62 = vrot.slane %v39, %v61
    %v63 = vmul.f32 %v54, %v58
    %v64 = vmul.f32 %v53, %v62
    %vm65 = vcmask 64512
    %v67 = vsel %vm65, %v20, 0
    %v70 = vsel %vm65, %v21, 0
    %72 = vmatprep.subr.mxu0 %v64
    %73 = vmatpush1.msra.mxu0 %v63
    %74 = vmatprep.subr.mxu0 0.0
    %75 = vmatpush1.msra.mxu0 0.0
    %76 = vmatprep.subr.mxu0 0.0
    %77 = vmatpush1.msra.mxu0 0.0
    %78 = vmatprep.subr.mxu0 0.0
    %79 = vmatpush1.msra.mxu0 0.0
    %80 = vmatprep.subr.mxu0 0.0
    %81 = vmatpush1.msra.mxu0 0.0
    %82 = vmatprep.subr.mxu0 0.0
    %83 = vmatpush1.msra.mxu0 0.0
    %84 = vmatprep.subr.mxu0 0.0
    %85 = vmatpush1.msra.mxu0 0.0
    %86 = vmatprep.subr.mxu0 0.0
    %87 = vmatpush1.msra.mxu0 0.0
    %88 = vmatprep.subr.mxu0 0.0
    %89 = vmatpush1.msra.mxu0 0.0
    %90 = vmatprep.subr.mxu0 0.0
    %91 = vmatpush1.msra.mxu0 0.0
    %92 = vmatprep.subr.mxu0 0.0
    %93 = vmatpush1.msra.mxu0 0.0
    %94 = vmatprep.subr.mxu0 0.0
    %95 = vmatpush1.msra.mxu0 0.0
    %96 = vmatprep.subr.mxu0 0.0
    %97 = vmatpush1.msra.mxu0 0.0
    %98 = vmatprep.subr.mxu0 0.0
    %99 = vmatpush1.msra.mxu0 0.0
    %100 = vmatprep.subr.mxu0 0.0
    %101 = vmatpush1.msra.mxu0 0.0
    %102 = vmatprep.subr.mxu0 0.0
    %103 = vmatpush1.msra.mxu0 0.0
    %104 = vmatprep.subr.mxu0 0.0
    %105 = vmatpush1.msra.mxu0 0.0
    %106 = vmatprep.subr.mxu0 0.0
    %107 = vmatpush1.msra.mxu0 0.0
    %108 = vmatprep.subr.mxu0 0.0
    %109 = vmatpush1.msra.mxu0 0.0
    %110 = vmatprep.subr.mxu0 0.0
    %111 = vmatpush1.msra.mxu0 0.0
    %112 = vmatprep.subr.mxu0 0.0
    %113 = vmatpush1.msra.mxu0 0.0
    %114 = vmatprep.subr.mxu0 0.0
    %115 = vmatpush1.msra.mxu0 0.0
    %116 = vmatprep.subr.mxu0 0.0
    %117 = vmatpush1.msra.mxu0 0.0
    %118 = vmatprep.subr.mxu0 0.0
    %119 = vmatpush1.msra.mxu0 0.0
    %120 = vmatprep.subr.mxu0 0.0
    %121 = vmatpush1.msra.mxu0 0.0
    %122 = vmatprep.subr.mxu0 0.0
    %123 = vmatpush1.msra.mxu0 0.0
    %124 = vmatprep.subr.mxu0 0.0
    %125 = vmatpush1.msra.mxu0 0.0
    %126 = vmatprep.subr.mxu0 0.0
    %127 = vmatpush1.msra.mxu0 0.0
    %128 = vmatprep.subr.mxu0 0.0
    %129 = vmatpush1.msra.mxu0 0.0
    %130 = vmatprep.subr.mxu0 0.0
    %131 = vmatpush1.msra.mxu0 0.0
    %132 = vmatprep.subr.mxu0 0.0
    %133 = vmatpush1.msra.mxu0 0.0
    %134 = vmatprep.subr.mxu0 0.0
    %135 = vmatpush1.msra.mxu0 0.0
    %136 = vmatprep.mubr.f32.mxu0 0.0
    %137 = vmatmul.mubr.f32.gmra.mrb[0].mxu0 %v67
    %v138 = vpop.f32.mrb[0].mxu0
    %v139 = vadd.f32 0.0, %v138
    %v140 = vpop.f32.mrb[0].mxu0
    %v141 = vadd.f32 0.0, %v140
    %142 = vmatprep.mubr.f32.mxu0 0.0
    %143 = vmatmul.mubr.f32.gmra.mrb[0].mxu0 %v70
    %v144 = vpop.f32.mrb[0].mxu0
    %v145 = vadd.f32 0.0, %v144
    %v146 = vpop.f32.mrb[0].mxu0
    %v147 = vadd.f32 0.0, %v146
    %148 = vdwg.mxu0
    %v149 = vadd.f32 %v42, %v139
    %v150 = vadd.f32 %v43, %v141
    %v151 = vadd.f32 %v44, %v145
    %v152 = vadd.f32 %v45, %v147
    %153 = vrot.lane.b32.xlu0 %v18, 16
    %v154 = vpop.permute.xlu0 %153
    %155 = vrot.lane.b32.xlu0 %v19, 16
    %v156 = vpop.permute.xlu0 %155
    %vm157 = vcmp.lt.s32.totalorder %v51, 16
    %v158 = vsel %vm157, %v154, %v156
    %v159 = vsel %vm157, %v156, %v154
    %v160 = vlaneseq
    %v161 = vshrl.u32 %v160, 7
    %v162 = vsub.s32 1, %v161
    %v163 = vrot.slane %v38, %v162
    %v164 = vlaneseq
    %v165 = vshrl.u32 %v164, 7
    %v166 = vsub.s32 1, %v165
    %v167 = vrot.slane %v39, %v166
    %v168 = vmul.f32 %v159, %v163
    %v169 = vmul.f32 %v158, %v167
    %v171 = vsel %vm65, %v22, 0
    %v174 = vsel %vm65, %v23, 0
    %176 = vmatprep.subr.mxu0 %v169
    %177 = vmatpush1.msra.mxu0 %v168
    %178 = vmatprep.subr.mxu0 0.0
    %179 = vmatpush1.msra.mxu0 0.0
    %180 = vmatprep.subr.mxu0 0.0
    %181 = vmatpush1.msra.mxu0 0.0
    %182 = vmatprep.subr.mxu0 0.0
    %183 = vmatpush1.msra.mxu0 0.0
    %184 = vmatprep.subr.mxu0 0.0
    %185 = vmatpush1.msra.mxu0 0.0
    %186 = vmatprep.subr.mxu0 0.0
    %187 = vmatpush1.msra.mxu0 0.0
    %188 = vmatprep.subr.mxu0 0.0
    %189 = vmatpush1.msra.mxu0 0.0
    %190 = vmatprep.subr.mxu0 0.0
    %191 = vmatpush1.msra.mxu0 0.0
    %192 = vmatprep.subr.mxu0 0.0
    %193 = vmatpush1.msra.mxu0 0.0
    %194 = vmatprep.subr.mxu0 0.0
    %195 = vmatpush1.msra.mxu0 0.0
    %196 = vmatprep.subr.mxu0 0.0
    %197 = vmatpush1.msra.mxu0 0.0
    %198 = vmatprep.subr.mxu0 0.0
    %199 = vmatpush1.msra.mxu0 0.0
    %200 = vmatprep.subr.mxu0 0.0
    %201 = vmatpush1.msra.mxu0 0.0
    %202 = vmatprep.subr.mxu0 0.0
    %203 = vmatpush1.msra.mxu0 0.0
    %204 = vmatprep.subr.mxu0 0.0
    %205 = vmatpush1.msra.mxu0 0.0
    %206 = vmatprep.subr.mxu0 0.0
    %207 = vmatpush1.msra.mxu0 0.0
    %208 = vmatprep.subr.mxu0 0.0
    %209 = vmatpush1.msra.mxu0 0.0
    %210 = vmatprep.subr.mxu0 0.0
    %211 = vmatpush1.msra.mxu0 0.0
    %212 = vmatprep.subr.mxu0 0.0
    %213 = vmatpush1.msra.mxu0 0.0
    %214 = vmatprep.subr.mxu0 0.0
    %215 = vmatpush1.msra.mxu0 0.0
    %216 = vmatprep.subr.mxu0 0.0
    %217 = vmatpush1.msra.mxu0 0.0
    %218 = vmatprep.subr.mxu0 0.0
    %219 = vmatpush1.msra.mxu0 0.0
    %220 = vmatprep.subr.mxu0 0.0
    %221 = vmatpush1.msra.mxu0 0.0
    %222 = vmatprep.subr.mxu0 0.0
    %223 = vmatpush1.msra.mxu0 0.0
    %224 = vmatprep.subr.mxu0 0.0
    %225 = vmatpush1.msra.mxu0 0.0
    %226 = vmatprep.subr.mxu0 0.0
    %227 = vmatpush1.msra.mxu0 0.0
    %228 = vmatprep.subr.mxu0 0.0
    %229 = vmatpush1.msra.mxu0 0.0
    %230 = vmatprep.subr.mxu0 0.0
    %231 = vmatpush1.msra.mxu0 0.0
    %232 = vmatprep.subr.mxu0 0.0
    %233 = vmatpush1.msra.mxu0 0.0
    %234 = vmatprep.subr.mxu0 0.0
    %235 = vmatpush1.msra.mxu0 0.0
    %236 = vmatprep.subr.mxu0 0.0
    %237 = vmatpush1.msra.mxu0 0.0
    %238 = vmatprep.subr.mxu0 0.0
    %239 = vmatpush1.msra.mxu0 0.0
    %240 = vmatprep.mubr.f32.mxu0 0.0
    %241 = vmatmul.mubr.f32.gmra.mrb[0].mxu0 %v171
    %v242 = vpop.f32.mrb[0].mxu0
    %v243 = vadd.f32 0.0, %v242
    %v244 = vpop.f32.mrb[0].mxu0
    %v245 = vadd.f32 0.0, %v244
    %246 = vmatprep.mubr.f32.mxu0 0.0
    %247 = vmatmul.mubr.f32.gmra.mrb[0].mxu0 %v174
    %v248 = vpop.f32.mrb[0].mxu0
    %v249 = vadd.f32 0.0, %v248
    %v250 = vpop.f32.mrb[0].mxu0
    %v251 = vadd.f32 0.0, %v250
    %252 = vdwg.mxu0
    %v253 = vadd.f32 %v149, %v243
    %v254 = vadd.f32 %v150, %v245
    %v255 = vadd.f32 %v151, %v249
    %v256 = vadd.f32 %v152, %v251
    %257 = vrot.lane.b32.xlu0 %v18, 15
    %v258 = vpop.permute.xlu0 %257
    %259 = vrot.lane.b32.xlu0 %v19, 15
    %v260 = vpop.permute.xlu0 %259
    %vm261 = vcmp.lt.s32.totalorder %v51, 15
    %v262 = vsel %vm261, %v258, %v260
    %v263 = vsel %vm261, %v260, %v258
    %v264 = vlaneseq
    %v265 = vshrl.u32 %v264, 7
    %v266 = vsub.s32 2, %v265
    %v267 = vrot.slane %v38, %v266
    %v268 = vlaneseq
    %v269 = vshrl.u32 %v268, 7
    %v270 = vsub.s32 2, %v269
    %v271 = vrot.slane %v39, %v270
    %v272 = vmul.f32 %v263, %v267
    %v273 = vmul.f32 %v262, %v271
    %v275 = vsel %vm65, %v24, 0
    %v278 = vsel %vm65, %v25, 0
    %280 = vmatprep.subr.mxu0 %v273
    %281 = vmatpush1.msra.mxu0 %v272
    %282 = vmatprep.subr.mxu0 0.0
    %283 = vmatpush1.msra.mxu0 0.0
    %284 = vmatprep.subr.mxu0 0.0
    %285 = vmatpush1.msra.mxu0 0.0
    %286 = vmatprep.subr.mxu0 0.0
    %287 = vmatpush1.msra.mxu0 0.0
    %288 = vmatprep.subr.mxu0 0.0
    %289 = vmatpush1.msra.mxu0 0.0
    %290 = vmatprep.subr.mxu0 0.0
    %291 = vmatpush1.msra.mxu0 0.0
    %292 = vmatprep.subr.mxu0 0.0
    %293 = vmatpush1.msra.mxu0 0.0
    %294 = vmatprep.subr.mxu0 0.0
    %295 = vmatpush1.msra.mxu0 0.0
    %296 = vmatprep.subr.mxu0 0.0
    %297 = vmatpush1.msra.mxu0 0.0
    %298 = vmatprep.subr.mxu0 0.0
    %299 = vmatpush1.msra.mxu0 0.0
    %300 = vmatprep.subr.mxu0 0.0
    %301 = vmatpush1.msra.mxu0 0.0
    %302 = vmatprep.subr.mxu0 0.0
    %303 = vmatpush1.msra.mxu0 0.0
    %304 = vmatprep.subr.mxu0 0.0
    %305 = vmatpush1.msra.mxu0 0.0
    %306 = vmatprep.subr.mxu0 0.0
    %307 = vmatpush1.msra.mxu0 0.0
    %308 = vmatprep.subr.mxu0 0.0
    %309 = vmatpush1.msra.mxu0 0.0
    %310 = vmatprep.subr.mxu0 0.0
    %311 = vmatpush1.msra.mxu0 0.0
    %312 = vmatprep.subr.mxu0 0.0
    %313 = vmatpush1.msra.mxu0 0.0
    %314 = vmatprep.subr.mxu0 0.0
    %315 = vmatpush1.msra.mxu0 0.0
    %316 = vmatprep.subr.mxu0 0.0
    %317 = vmatpush1.msra.mxu0 0.0
    %318 = vmatprep.subr.mxu0 0.0
    %319 = vmatpush1.msra.mxu0 0.0
    %320 = vmatprep.subr.mxu0 0.0
    %321 = vmatpush1.msra.mxu0 0.0
    %322 = vmatprep.subr.mxu0 0.0
    %323 = vmatpush1.msra.mxu0 0.0
    %324 = vmatprep.subr.mxu0 0.0
    %325 = vmatpush1.msra.mxu0 0.0
    %326 = vmatprep.subr.mxu0 0.0
    %327 = vmatpush1.msra.mxu0 0.0
    %328 = vmatprep.subr.mxu0 0.0
    %329 = vmatpush1.msra.mxu0 0.0
    %330 = vmatprep.subr.mxu0 0.0
    %331 = vmatpush1.msra.mxu0 0.0
    %332 = vmatprep.subr.mxu0 0.0
    %333 = vmatpush1.msra.mxu0 0.0
    %334 = vmatprep.subr.mxu0 0.0
    %335 = vmatpush1.msra.mxu0 0.0
    %336 = vmatprep.subr.mxu0 0.0
    %337 = vmatpush1.msra.mxu0 0.0
    %338 = vmatprep.subr.mxu0 0.0
    %339 = vmatpush1.msra.mxu0 0.0
    %340 = vmatprep.subr.mxu0 0.0
    %341 = vmatpush1.msra.mxu0 0.0
    %342 = vmatprep.subr.mxu0 0.0
    %343 = vmatpush1.msra.mxu0 0.0
    %344 = vmatprep.mubr.f32.mxu0 0.0
    %345 = vmatmul.mubr.f32.gmra.mrb[0].mxu0 %v275
    %v346 = vpop.f32.mrb[0].mxu0
    %v347 = vadd.f32 0.0, %v346
    %v348 = vpop.f32.mrb[0].mxu0
    %v349 = vadd.f32 0.0, %v348
    %350 = vmatprep.mubr.f32.mxu0 0.0
    %351 = vmatmul.mubr.f32.gmra.mrb[0].mxu0 %v278
    %v352 = vpop.f32.mrb[0].mxu0
    %v353 = vadd.f32 0.0, %v352
    %v354 = vpop.f32.mrb[0].mxu0
    %v355 = vadd.f32 0.0, %v354
    %356 = vdwg.mxu0
    %v357 = vadd.f32 %v253, %v347
    %v358 = vadd.f32 %v254, %v349
    %v359 = vadd.f32 %v255, %v353
    %v360 = vadd.f32 %v256, %v355
    %361 = vrot.lane.b32.xlu0 %v18, 1
    %v362 = vpop.permute.xlu0 %361
    %363 = vrot.lane.b32.xlu0 %v19, 1
    %v364 = vpop.permute.xlu0 %363
    %vm365 = vcmp.lt.s32.totalorder %v51, 1
    %v366 = vsel %vm365, %v362, %v364
    %v367 = vsel %vm365, %v364, %v362
    %v368 = vlaneseq
    %v369 = vshrl.u32 %v368, 7
    %v370 = vsub.s32 3, %v369
    %v371 = vrot.slane %v38, %v370
    %v372 = vlaneseq
    %v373 = vshrl.u32 %v372, 7
    %v374 = vsub.s32 3, %v373
    %v375 = vrot.slane %v39, %v374
    %v376 = vmul.f32 %v367, %v371
    %v377 = vmul.f32 %v366, %v375
    %v379 = vsel %vm65, %v26, 0
    %v382 = vsel %vm65, %v27, 0
    %384 = vmatprep.subr.mxu0 %v377
    %385 = vmatpush1.msra.mxu0 %v376
    %386 = vmatprep.subr.mxu0 0.0
    %387 = vmatpush1.msra.mxu0 0.0
    %388 = vmatprep.subr.mxu0 0.0
    %389 = vmatpush1.msra.mxu0 0.0
    %390 = vmatprep.subr.mxu0 0.0
    %391 = vmatpush1.msra.mxu0 0.0
    %392 = vmatprep.subr.mxu0 0.0
    %393 = vmatpush1.msra.mxu0 0.0
    %394 = vmatprep.subr.mxu0 0.0
    %395 = vmatpush1.msra.mxu0 0.0
    %396 = vmatprep.subr.mxu0 0.0
    %397 = vmatpush1.msra.mxu0 0.0
    %398 = vmatprep.subr.mxu0 0.0
    %399 = vmatpush1.msra.mxu0 0.0
    %400 = vmatprep.subr.mxu0 0.0
    %401 = vmatpush1.msra.mxu0 0.0
    %402 = vmatprep.subr.mxu0 0.0
    %403 = vmatpush1.msra.mxu0 0.0
    %404 = vmatprep.subr.mxu0 0.0
    %405 = vmatpush1.msra.mxu0 0.0
    %406 = vmatprep.subr.mxu0 0.0
    %407 = vmatpush1.msra.mxu0 0.0
    %408 = vmatprep.subr.mxu0 0.0
    %409 = vmatpush1.msra.mxu0 0.0
    %410 = vmatprep.subr.mxu0 0.0
    %411 = vmatpush1.msra.mxu0 0.0
    %412 = vmatprep.subr.mxu0 0.0
    %413 = vmatpush1.msra.mxu0 0.0
    %414 = vmatprep.subr.mxu0 0.0
    %415 = vmatpush1.msra.mxu0 0.0
    %416 = vmatprep.subr.mxu0 0.0
    %417 = vmatpush1.msra.mxu0 0.0
    %418 = vmatprep.subr.mxu0 0.0
    %419 = vmatpush1.msra.mxu0 0.0
    %420 = vmatprep.subr.mxu0 0.0
    %421 = vmatpush1.msra.mxu0 0.0
    %422 = vmatprep.subr.mxu0 0.0
    %423 = vmatpush1.msra.mxu0 0.0
    %424 = vmatprep.subr.mxu0 0.0
    %425 = vmatpush1.msra.mxu0 0.0
    %426 = vmatprep.subr.mxu0 0.0
    %427 = vmatpush1.msra.mxu0 0.0
    %428 = vmatprep.subr.mxu0 0.0
    %429 = vmatpush1.msra.mxu0 0.0
    %430 = vmatprep.subr.mxu0 0.0
    %431 = vmatpush1.msra.mxu0 0.0
    %432 = vmatprep.subr.mxu0 0.0
    %433 = vmatpush1.msra.mxu0 0.0
    %434 = vmatprep.subr.mxu0 0.0
    %435 = vmatpush1.msra.mxu0 0.0
    %436 = vmatprep.subr.mxu0 0.0
    %437 = vmatpush1.msra.mxu0 0.0
    %438 = vmatprep.subr.mxu0 0.0
    %439 = vmatpush1.msra.mxu0 0.0
    %440 = vmatprep.subr.mxu0 0.0
    %441 = vmatpush1.msra.mxu0 0.0
    %442 = vmatprep.subr.mxu0 0.0
    %443 = vmatpush1.msra.mxu0 0.0
    %444 = vmatprep.subr.mxu0 0.0
    %445 = vmatpush1.msra.mxu0 0.0
    %446 = vmatprep.subr.mxu0 0.0
    %447 = vmatpush1.msra.mxu0 0.0
    %448 = vmatprep.mubr.f32.mxu0 0.0
    %449 = vmatmul.mubr.f32.gmra.mrb[0].mxu0 %v379
    %v450 = vpop.f32.mrb[0].mxu0
    %v451 = vadd.f32 0.0, %v450
    %v452 = vpop.f32.mrb[0].mxu0
    %v453 = vadd.f32 0.0, %v452
    %454 = vmatprep.mubr.f32.mxu0 0.0
    %455 = vmatmul.mubr.f32.gmra.mrb[0].mxu0 %v382
    %v456 = vpop.f32.mrb[0].mxu0
    %v457 = vadd.f32 0.0, %v456
    %v458 = vpop.f32.mrb[0].mxu0
    %v459 = vadd.f32 0.0, %v458
    %460 = vdwg.mxu0
    %v461 = vadd.f32 %v357, %v451
    %v462 = vadd.f32 %v358, %v453
    %v463 = vadd.f32 %v359, %v457
    %v464 = vadd.f32 %v360, %v459
    %v465 = vlaneseq
    %v466 = vshrl.u32 %v465, 7
    %v467 = vsub.s32 4, %v466
    %v468 = vrot.slane %v38, %v467
    %v469 = vlaneseq
    %v470 = vshrl.u32 %v469, 7
    %v471 = vsub.s32 4, %v470
    %v472 = vrot.slane %v39, %v471
    %v473 = vmul.f32 %v18, %v468
    %v474 = vmul.f32 %v19, %v472
    %v476 = vsel %vm65, %v28, 0
    %v479 = vsel %vm65, %v29, 0
    %481 = vmatprep.subr.mxu0 %v474
    %482 = vmatpush1.msra.mxu0 %v473
    %483 = vmatprep.subr.mxu0 0.0
    %484 = vmatpush1.msra.mxu0 0.0
    %485 = vmatprep.subr.mxu0 0.0
    %486 = vmatpush1.msra.mxu0 0.0
    %487 = vmatprep.subr.mxu0 0.0
    %488 = vmatpush1.msra.mxu0 0.0
    %489 = vmatprep.subr.mxu0 0.0
    %490 = vmatpush1.msra.mxu0 0.0
    %491 = vmatprep.subr.mxu0 0.0
    %492 = vmatpush1.msra.mxu0 0.0
    %493 = vmatprep.subr.mxu0 0.0
    %494 = vmatpush1.msra.mxu0 0.0
    %495 = vmatprep.subr.mxu0 0.0
    %496 = vmatpush1.msra.mxu0 0.0
    %497 = vmatprep.subr.mxu0 0.0
    %498 = vmatpush1.msra.mxu0 0.0
    %499 = vmatprep.subr.mxu0 0.0
    %500 = vmatpush1.msra.mxu0 0.0
    %501 = vmatprep.subr.mxu0 0.0
    %502 = vmatpush1.msra.mxu0 0.0
    %503 = vmatprep.subr.mxu0 0.0
    %504 = vmatpush1.msra.mxu0 0.0
    %505 = vmatprep.subr.mxu0 0.0
    %506 = vmatpush1.msra.mxu0 0.0
    %507 = vmatprep.subr.mxu0 0.0
    %508 = vmatpush1.msra.mxu0 0.0
    %509 = vmatprep.subr.mxu0 0.0
    %510 = vmatpush1.msra.mxu0 0.0
    %511 = vmatprep.subr.mxu0 0.0
    %512 = vmatpush1.msra.mxu0 0.0
    %513 = vmatprep.subr.mxu0 0.0
    %514 = vmatpush1.msra.mxu0 0.0
    %515 = vmatprep.subr.mxu0 0.0
    %516 = vmatpush1.msra.mxu0 0.0
    %517 = vmatprep.subr.mxu0 0.0
    %518 = vmatpush1.msra.mxu0 0.0
    %519 = vmatprep.subr.mxu0 0.0
    %520 = vmatpush1.msra.mxu0 0.0
    %521 = vmatprep.subr.mxu0 0.0
    %522 = vmatpush1.msra.mxu0 0.0
    %523 = vmatprep.subr.mxu0 0.0
    %524 = vmatpush1.msra.mxu0 0.0
    %525 = vmatprep.subr.mxu0 0.0
    %526 = vmatpush1.msra.mxu0 0.0
    %527 = vmatprep.subr.mxu0 0.0
    %528 = vmatpush1.msra.mxu0 0.0
    %529 = vmatprep.subr.mxu0 0.0
    %530 = vmatpush1.msra.mxu0 0.0
    %531 = vmatprep.subr.mxu0 0.0
    %532 = vmatpush1.msra.mxu0 0.0
    %533 = vmatprep.subr.mxu0 0.0
    %534 = vmatpush1.msra.mxu0 0.0
    %535 = vmatprep.subr.mxu0 0.0
    %536 = vmatpush1.msra.mxu0 0.0
    %537 = vmatprep.subr.mxu0 0.0
    %538 = vmatpush1.msra.mxu0 0.0
    %539 = vmatprep.subr.mxu0 0.0
    %540 = vmatpush1.msra.mxu0 0.0
    %541 = vmatprep.subr.mxu0 0.0
    %542 = vmatpush1.msra.mxu0 0.0
    %543 = vmatprep.subr.mxu0 0.0
    %544 = vmatpush1.msra.mxu0 0.0
    %545 = vmatprep.mubr.f32.mxu0 0.0
    %546 = vmatmul.mubr.f32.gmra.mrb[0].mxu0 %v476
    %v547 = vpop.f32.mrb[0].mxu0
    %v548 = vadd.f32 0.0, %v547
    %v549 = vpop.f32.mrb[0].mxu0
    %v550 = vadd.f32 0.0, %v549
    %551 = vmatprep.mubr.f32.mxu0 0.0
    %552 = vmatmul.mubr.f32.gmra.mrb[0].mxu0 %v479
    %v553 = vpop.f32.mrb[0].mxu0
    %v554 = vadd.f32 0.0, %v553
    %v555 = vpop.f32.mrb[0].mxu0
    %v556 = vadd.f32 0.0, %v555
    %557 = vdwg.mxu0
    %v558 = vadd.f32 %v461, %v548
    %v559 = vadd.f32 %v462, %v550
    %v560 = vadd.f32 %v463, %v554
    %v561 = vadd.f32 %v464, %v556
    %562 = vrot.lane.b32.xlu0 %v18, 127
    %v563 = vpop.permute.xlu0 %562
    %564 = vrot.lane.b32.xlu0 %v19, 127
    %v565 = vpop.permute.xlu0 %564
    %vm566 = vcmp.lt.s32.totalorder %v51, 127
    %v567 = vsel %vm566, %v563, %v565
    %v568 = vsel %vm566, %v565, %v563
    %v569 = vlaneseq
    %v570 = vshrl.u32 %v569, 7
    %v571 = vsub.s32 5, %v570
    %v572 = vrot.slane %v38, %v571
    %v573 = vlaneseq
    %v574 = vshrl.u32 %v573, 7
    %v575 = vsub.s32 5, %v574
    %v576 = vrot.slane %v39, %v575
    %v577 = vmul.f32 %v567, %v572
    %v578 = vmul.f32 %v568, %v576
    %v580 = vsel %vm65, %v30, 0
    %v583 = vsel %vm65, %v31, 0
    %585 = vmatprep.subr.mxu0 %v578
    %586 = vmatpush1.msra.mxu0 %v577
    %587 = vmatprep.subr.mxu0 0.0
    %588 = vmatpush1.msra.mxu0 0.0
    %589 = vmatprep.subr.mxu0 0.0
    %590 = vmatpush1.msra.mxu0 0.0
    %591 = vmatprep.subr.mxu0 0.0
    %592 = vmatpush1.msra.mxu0 0.0
    %593 = vmatprep.subr.mxu0 0.0
    %594 = vmatpush1.msra.mxu0 0.0
    %595 = vmatprep.subr.mxu0 0.0
    %596 = vmatpush1.msra.mxu0 0.0
    %597 = vmatprep.subr.mxu0 0.0
    %598 = vmatpush1.msra.mxu0 0.0
    %599 = vmatprep.subr.mxu0 0.0
    %600 = vmatpush1.msra.mxu0 0.0
    %601 = vmatprep.subr.mxu0 0.0
    %602 = vmatpush1.msra.mxu0 0.0
    %603 = vmatprep.subr.mxu0 0.0
    %604 = vmatpush1.msra.mxu0 0.0
    %605 = vmatprep.subr.mxu0 0.0
    %606 = vmatpush1.msra.mxu0 0.0
    %607 = vmatprep.subr.mxu0 0.0
    %608 = vmatpush1.msra.mxu0 0.0
    %609 = vmatprep.subr.mxu0 0.0
    %610 = vmatpush1.msra.mxu0 0.0
    %611 = vmatprep.subr.mxu0 0.0
    %612 = vmatpush1.msra.mxu0 0.0
    %613 = vmatprep.subr.mxu0 0.0
    %614 = vmatpush1.msra.mxu0 0.0
    %615 = vmatprep.subr.mxu0 0.0
    %616 = vmatpush1.msra.mxu0 0.0
    %617 = vmatprep.subr.mxu0 0.0
    %618 = vmatpush1.msra.mxu0 0.0
    %619 = vmatprep.subr.mxu0 0.0
    %620 = vmatpush1.msra.mxu0 0.0
    %621 = vmatprep.subr.mxu0 0.0
    %622 = vmatpush1.msra.mxu0 0.0
    %623 = vmatprep.subr.mxu0 0.0
    %624 = vmatpush1.msra.mxu0 0.0
    %625 = vmatprep.subr.mxu0 0.0
    %626 = vmatpush1.msra.mxu0 0.0
    %627 = vmatprep.subr.mxu0 0.0
    %628 = vmatpush1.msra.mxu0 0.0
    %629 = vmatprep.subr.mxu0 0.0
    %630 = vmatpush1.msra.mxu0 0.0
    %631 = vmatprep.subr.mxu0 0.0
    %632 = vmatpush1.msra.mxu0 0.0
    %633 = vmatprep.subr.mxu0 0.0
    %634 = vmatpush1.msra.mxu0 0.0
    %635 = vmatprep.subr.mxu0 0.0
    %636 = vmatpush1.msra.mxu0 0.0
    %637 = vmatprep.subr.mxu0 0.0
    %638 = vmatpush1.msra.mxu0 0.0
    %639 = vmatprep.subr.mxu0 0.0
    %640 = vmatpush1.msra.mxu0 0.0
    %641 = vmatprep.subr.mxu0 0.0
    %642 = vmatpush1.msra.mxu0 0.0
    %643 = vmatprep.subr.mxu0 0.0
    %644 = vmatpush1.msra.mxu0 0.0
    %645 = vmatprep.subr.mxu0 0.0
    %646 = vmatpush1.msra.mxu0 0.0
    %647 = vmatprep.subr.mxu0 0.0
    %648 = vmatpush1.msra.mxu0 0.0
    %649 = vmatprep.mubr.f32.mxu0 0.0
    %650 = vmatmul.mubr.f32.gmra.mrb[0].mxu0 %v580
    %v651 = vpop.f32.mrb[0].mxu0
    %v652 = vadd.f32 0.0, %v651
    %v653 = vpop.f32.mrb[0].mxu0
    %v654 = vadd.f32 0.0, %v653
    %655 = vmatprep.mubr.f32.mxu0 0.0
    %656 = vmatmul.mubr.f32.gmra.mrb[0].mxu0 %v583
    %v657 = vpop.f32.mrb[0].mxu0
    %v658 = vadd.f32 0.0, %v657
    %v659 = vpop.f32.mrb[0].mxu0
    %v660 = vadd.f32 0.0, %v659
    %661 = vdwg.mxu0
    %v662 = vadd.f32 %v558, %v652
    %v663 = vadd.f32 %v559, %v654
    %v664 = vadd.f32 %v560, %v658
    %v665 = vadd.f32 %v561, %v660
    %666 = vrot.lane.b32.xlu0 %v18, 113
    %v667 = vpop.permute.xlu0 %666
    %668 = vrot.lane.b32.xlu0 %v19, 113
    %v669 = vpop.permute.xlu0 %668
    %vm670 = vcmp.lt.s32.totalorder %v51, 113
    %v671 = vsel %vm670, %v667, %v669
    %v672 = vsel %vm670, %v669, %v667
    %v673 = vlaneseq
    %v674 = vshrl.u32 %v673, 7
    %v675 = vsub.s32 6, %v674
    %v676 = vrot.slane %v38, %v675
    %v677 = vlaneseq
    %v678 = vshrl.u32 %v677, 7
    %v679 = vsub.s32 6, %v678
    %v680 = vrot.slane %v39, %v679
    %v681 = vmul.f32 %v671, %v676
    %v682 = vmul.f32 %v672, %v680
    %v684 = vsel %vm65, %v32, 0
    %v687 = vsel %vm65, %v33, 0
    %689 = vmatprep.subr.mxu0 %v682
    %690 = vmatpush1.msra.mxu0 %v681
    %691 = vmatprep.subr.mxu0 0.0
    %692 = vmatpush1.msra.mxu0 0.0
    %693 = vmatprep.subr.mxu0 0.0
    %694 = vmatpush1.msra.mxu0 0.0
    %695 = vmatprep.subr.mxu0 0.0
    %696 = vmatpush1.msra.mxu0 0.0
    %697 = vmatprep.subr.mxu0 0.0
    %698 = vmatpush1.msra.mxu0 0.0
    %699 = vmatprep.subr.mxu0 0.0
    %700 = vmatpush1.msra.mxu0 0.0
    %701 = vmatprep.subr.mxu0 0.0
    %702 = vmatpush1.msra.mxu0 0.0
    %703 = vmatprep.subr.mxu0 0.0
    %704 = vmatpush1.msra.mxu0 0.0
    %705 = vmatprep.subr.mxu0 0.0
    %706 = vmatpush1.msra.mxu0 0.0
    %707 = vmatprep.subr.mxu0 0.0
    %708 = vmatpush1.msra.mxu0 0.0
    %709 = vmatprep.subr.mxu0 0.0
    %710 = vmatpush1.msra.mxu0 0.0
    %711 = vmatprep.subr.mxu0 0.0
    %712 = vmatpush1.msra.mxu0 0.0
    %713 = vmatprep.subr.mxu0 0.0
    %714 = vmatpush1.msra.mxu0 0.0
    %715 = vmatprep.subr.mxu0 0.0
    %716 = vmatpush1.msra.mxu0 0.0
    %717 = vmatprep.subr.mxu0 0.0
    %718 = vmatpush1.msra.mxu0 0.0
    %719 = vmatprep.subr.mxu0 0.0
    %720 = vmatpush1.msra.mxu0 0.0
    %721 = vmatprep.subr.mxu0 0.0
    %722 = vmatpush1.msra.mxu0 0.0
    %723 = vmatprep.subr.mxu0 0.0
    %724 = vmatpush1.msra.mxu0 0.0
    %725 = vmatprep.subr.mxu0 0.0
    %726 = vmatpush1.msra.mxu0 0.0
    %727 = vmatprep.subr.mxu0 0.0
    %728 = vmatpush1.msra.mxu0 0.0
    %729 = vmatprep.subr.mxu0 0.0
    %730 = vmatpush1.msra.mxu0 0.0
    %731 = vmatprep.subr.mxu0 0.0
    %732 = vmatpush1.msra.mxu0 0.0
    %733 = vmatprep.subr.mxu0 0.0
    %734 = vmatpush1.msra.mxu0 0.0
    %735 = vmatprep.subr.mxu0 0.0
    %736 = vmatpush1.msra.mxu0 0.0
    %737 = vmatprep.subr.mxu0 0.0
    %738 = vmatpush1.msra.mxu0 0.0
    %739 = vmatprep.subr.mxu0 0.0
    %740 = vmatpush1.msra.mxu0 0.0
    %741 = vmatprep.subr.mxu0 0.0
    %742 = vmatpush1.msra.mxu0 0.0
    %743 = vmatprep.subr.mxu0 0.0
    %744 = vmatpush1.msra.mxu0 0.0
    %745 = vmatprep.subr.mxu0 0.0
    %746 = vmatpush1.msra.mxu0 0.0
    %747 = vmatprep.subr.mxu0 0.0
    %748 = vmatpush1.msra.mxu0 0.0
    %749 = vmatprep.subr.mxu0 0.0
    %750 = vmatpush1.msra.mxu0 0.0
    %751 = vmatprep.subr.mxu0 0.0
    %752 = vmatpush1.msra.mxu0 0.0
    %753 = vmatprep.mubr.f32.mxu0 0.0
    %754 = vmatmul.mubr.f32.gmra.mrb[0].mxu0 %v684
    %v755 = vpop.f32.mrb[0].mxu0
    %v756 = vadd.f32 0.0, %v755
    %v757 = vpop.f32.mrb[0].mxu0
    %v758 = vadd.f32 0.0, %v757
    %759 = vmatprep.mubr.f32.mxu0 0.0
    %760 = vmatmul.mubr.f32.gmra.mrb[0].mxu0 %v687
    %v761 = vpop.f32.mrb[0].mxu0
    %v762 = vadd.f32 0.0, %v761
    %v763 = vpop.f32.mrb[0].mxu0
    %v764 = vadd.f32 0.0, %v763
    %765 = vdwg.mxu0
    %v766 = vadd.f32 %v662, %v756
    %v767 = vadd.f32 %v663, %v758
    %v768 = vadd.f32 %v664, %v762
    %v769 = vadd.f32 %v665, %v764
    %770 = vrot.lane.b32.xlu0 %v18, 112
    %v771 = vpop.permute.xlu0 %770
    %772 = vrot.lane.b32.xlu0 %v19, 112
    %v773 = vpop.permute.xlu0 %772
    %vm774 = vcmp.lt.s32.totalorder %v51, 112
    %v775 = vsel %vm774, %v771, %v773
    %v776 = vsel %vm774, %v773, %v771
    %v777 = vlaneseq
    %v778 = vshrl.u32 %v777, 7
    %v779 = vsub.s32 7, %v778
    %v780 = vrot.slane %v38, %v779
    %v781 = vlaneseq
    %v782 = vshrl.u32 %v781, 7
    %v783 = vsub.s32 7, %v782
    %v784 = vrot.slane %v39, %v783
    %v785 = vmul.f32 %v775, %v780
    %v786 = vmul.f32 %v776, %v784
    %v788 = vsel %vm65, %v34, 0
    %v791 = vsel %vm65, %v35, 0
    %793 = vmatprep.subr.mxu0 %v786
    %794 = vmatpush1.msra.mxu0 %v785
    %795 = vmatprep.subr.mxu0 0.0
    %796 = vmatpush1.msra.mxu0 0.0
    %797 = vmatprep.subr.mxu0 0.0
    %798 = vmatpush1.msra.mxu0 0.0
    %799 = vmatprep.subr.mxu0 0.0
    %800 = vmatpush1.msra.mxu0 0.0
    %801 = vmatprep.subr.mxu0 0.0
    %802 = vmatpush1.msra.mxu0 0.0
    %803 = vmatprep.subr.mxu0 0.0
    %804 = vmatpush1.msra.mxu0 0.0
    %805 = vmatprep.subr.mxu0 0.0
    %806 = vmatpush1.msra.mxu0 0.0
    %807 = vmatprep.subr.mxu0 0.0
    %808 = vmatpush1.msra.mxu0 0.0
    %809 = vmatprep.subr.mxu0 0.0
    %810 = vmatpush1.msra.mxu0 0.0
    %811 = vmatprep.subr.mxu0 0.0
    %812 = vmatpush1.msra.mxu0 0.0
    %813 = vmatprep.subr.mxu0 0.0
    %814 = vmatpush1.msra.mxu0 0.0
    %815 = vmatprep.subr.mxu0 0.0
    %816 = vmatpush1.msra.mxu0 0.0
    %817 = vmatprep.subr.mxu0 0.0
    %818 = vmatpush1.msra.mxu0 0.0
    %819 = vmatprep.subr.mxu0 0.0
    %820 = vmatpush1.msra.mxu0 0.0
    %821 = vmatprep.subr.mxu0 0.0
    %822 = vmatpush1.msra.mxu0 0.0
    %823 = vmatprep.subr.mxu0 0.0
    %824 = vmatpush1.msra.mxu0 0.0
    %825 = vmatprep.subr.mxu0 0.0
    %826 = vmatpush1.msra.mxu0 0.0
    %827 = vmatprep.subr.mxu0 0.0
    %828 = vmatpush1.msra.mxu0 0.0
    %829 = vmatprep.subr.mxu0 0.0
    %830 = vmatpush1.msra.mxu0 0.0
    %831 = vmatprep.subr.mxu0 0.0
    %832 = vmatpush1.msra.mxu0 0.0
    %833 = vmatprep.subr.mxu0 0.0
    %834 = vmatpush1.msra.mxu0 0.0
    %835 = vmatprep.subr.mxu0 0.0
    %836 = vmatpush1.msra.mxu0 0.0
    %837 = vmatprep.subr.mxu0 0.0
    %838 = vmatpush1.msra.mxu0 0.0
    %839 = vmatprep.subr.mxu0 0.0
    %840 = vmatpush1.msra.mxu0 0.0
    %841 = vmatprep.subr.mxu0 0.0
    %842 = vmatpush1.msra.mxu0 0.0
    %843 = vmatprep.subr.mxu0 0.0
    %844 = vmatpush1.msra.mxu0 0.0
    %845 = vmatprep.subr.mxu0 0.0
    %846 = vmatpush1.msra.mxu0 0.0
    %847 = vmatprep.subr.mxu0 0.0
    %848 = vmatpush1.msra.mxu0 0.0
    %849 = vmatprep.subr.mxu0 0.0
    %850 = vmatpush1.msra.mxu0 0.0
    %851 = vmatprep.subr.mxu0 0.0
    %852 = vmatpush1.msra.mxu0 0.0
    %853 = vmatprep.subr.mxu0 0.0
    %854 = vmatpush1.msra.mxu0 0.0
    %855 = vmatprep.subr.mxu0 0.0
    %856 = vmatpush1.msra.mxu0 0.0
    %857 = vmatprep.mubr.f32.mxu0 0.0
    %858 = vmatmul.mubr.f32.gmra.mrb[0].mxu0 %v788
    %v859 = vpop.f32.mrb[0].mxu0
    %v860 = vadd.f32 0.0, %v859
    %v861 = vpop.f32.mrb[0].mxu0
    %v862 = vadd.f32 0.0, %v861
    %863 = vmatprep.mubr.f32.mxu0 0.0
    %864 = vmatmul.mubr.f32.gmra.mrb[0].mxu0 %v791
    %v865 = vpop.f32.mrb[0].mxu0
    %v866 = vadd.f32 0.0, %v865
    %v867 = vpop.f32.mrb[0].mxu0
    %v868 = vadd.f32 0.0, %v867
    %869 = vdwg.mxu0
    %v870 = vadd.f32 %v766, %v860
    %v871 = vadd.f32 %v767, %v862
    %v872 = vadd.f32 %v768, %v866
    %v873 = vadd.f32 %v769, %v868
    %874 = vrot.lane.b32.xlu0 %v18, 111
    %v875 = vpop.permute.xlu0 %874
    %876 = vrot.lane.b32.xlu0 %v19, 111
    %v877 = vpop.permute.xlu0 %876
    %vm878 = vcmp.lt.s32.totalorder %v51, 111
    %v879 = vsel %vm878, %v875, %v877
    %v880 = vsel %vm878, %v877, %v875
    %v881 = vlaneseq
    %v882 = vshrl.u32 %v881, 7
    %v883 = vsub.s32 0, %v882
    %v884 = vrot.slane %v40, %v883
    %v885 = vlaneseq
    %v886 = vshrl.u32 %v885, 7
    %v887 = vsub.s32 0, %v886
    %v888 = vrot.slane %v41, %v887
    %v889 = vmul.f32 %v879, %v884
    %v890 = vmul.f32 %v880, %v888
    %v892 = vsel %vm65, %v36, 0
    %v895 = vsel %vm65, %v37, 0
    %897 = vmatprep.subr.mxu0 %v890
    %898 = vmatpush1.msra.mxu0 %v889
    %899 = vmatprep.subr.mxu0 0.0
    %900 = vmatpush1.msra.mxu0 0.0
    %901 = vmatprep.subr.mxu0 0.0
    %902 = vmatpush1.msra.mxu0 0.0
    %903 = vmatprep.subr.mxu0 0.0
    %904 = vmatpush1.msra.mxu0 0.0
    %905 = vmatprep.subr.mxu0 0.0
    %906 = vmatpush1.msra.mxu0 0.0
    %907 = vmatprep.subr.mxu0 0.0
    %908 = vmatpush1.msra.mxu0 0.0
    %909 = vmatprep.subr.mxu0 0.0
    %910 = vmatpush1.msra.mxu0 0.0
    %911 = vmatprep.subr.mxu0 0.0
    %912 = vmatpush1.msra.mxu0 0.0
    %913 = vmatprep.subr.mxu0 0.0
    %914 = vmatpush1.msra.mxu0 0.0
    %915 = vmatprep.subr.mxu0 0.0
    %916 = vmatpush1.msra.mxu0 0.0
    %917 = vmatprep.subr.mxu0 0.0
    %918 = vmatpush1.msra.mxu0 0.0
    %919 = vmatprep.subr.mxu0 0.0
    %920 = vmatpush1.msra.mxu0 0.0
    %921 = vmatprep.subr.mxu0 0.0
    %922 = vmatpush1.msra.mxu0 0.0
    %923 = vmatprep.subr.mxu0 0.0
    %924 = vmatpush1.msra.mxu0 0.0
    %925 = vmatprep.subr.mxu0 0.0
    %926 = vmatpush1.msra.mxu0 0.0
    %927 = vmatprep.subr.mxu0 0.0
    %928 = vmatpush1.msra.mxu0 0.0
    %929 = vmatprep.subr.mxu0 0.0
    %930 = vmatpush1.msra.mxu0 0.0
    %931 = vmatprep.subr.mxu0 0.0
    %932 = vmatpush1.msra.mxu0 0.0
    %933 = vmatprep.subr.mxu0 0.0
    %934 = vmatpush1.msra.mxu0 0.0
    %935 = vmatprep.subr.mxu0 0.0
    %936 = vmatpush1.msra.mxu0 0.0
    %937 = vmatprep.subr.mxu0 0.0
    %938 = vmatpush1.msra.mxu0 0.0
    %939 = vmatprep.subr.mxu0 0.0
    %940 = vmatpush1.msra.mxu0 0.0
    %941 = vmatprep.subr.mxu0 0.0
    %942 = vmatpush1.msra.mxu0 0.0
    %943 = vmatprep.subr.mxu0 0.0
    %944 = vmatpush1.msra.mxu0 0.0
    %945 = vmatprep.subr.mxu0 0.0
    %946 = vmatpush1.msra.mxu0 0.0
    %947 = vmatprep.subr.mxu0 0.0
    %948 = vmatpush1.msra.mxu0 0.0
    %949 = vmatprep.subr.mxu0 0.0
    %950 = vmatpush1.msra.mxu0 0.0
    %951 = vmatprep.subr.mxu0 0.0
    %952 = vmatpush1.msra.mxu0 0.0
    %953 = vmatprep.subr.mxu0 0.0
    %954 = vmatpush1.msra.mxu0 0.0
    %955 = vmatprep.subr.mxu0 0.0
    %956 = vmatpush1.msra.mxu0 0.0
    %957 = vmatprep.subr.mxu0 0.0
    %958 = vmatpush1.msra.mxu0 0.0
    %959 = vmatprep.subr.mxu0 0.0
    %960 = vmatpush1.msra.mxu0 0.0
    %961 = vmatprep.mubr.f32.mxu0 0.0
    %962 = vmatmul.mubr.f32.gmra.mrb[0].mxu0 %v892
    %v963 = vpop.f32.mrb[0].mxu0
    %v964 = vadd.f32 0.0, %v963
    %v965 = vpop.f32.mrb[0].mxu0
    %v966 = vadd.f32 0.0, %v965
    %967 = vmatprep.mubr.f32.mxu0 0.0
    %968 = vmatmul.mubr.f32.gmra.mrb[0].mxu0 %v895
    %v969 = vpop.f32.mrb[0].mxu0
    %v970 = vadd.f32 0.0, %v969
    %v971 = vpop.f32.mrb[0].mxu0
    %v972 = vadd.f32 0.0, %v971
    %973 = vdwg.mxu0
    %v974 = vadd.f32 %v870, %v964
    %v975 = vadd.f32 %v871, %v966
    %v976 = vadd.f32 %v872, %v970
    %v977 = vadd.f32 %v873, %v972
    %v978 = vmax.f32 %v974, 0.0
    %v979 = vmax.f32 %v975, 0.0
    %v980 = vmax.f32 %v976, 0.0
    %v981 = vmax.f32 %v977, 0.0
    %982 = vst [vmem:[#allocation2] sm:$0xff] %v978
    %983 = vst [vmem:[#allocation2 + $0x8] sm:$0xff] %v979
    %984 = vst [vmem:[#allocation2 + $0x10] sm:$0xff] %v980
    %985 = vst [vmem:[#allocation2 + $0x18] sm:$0xff] %v981
    // Predicated region
    $region18: #{tpu_custom_call.1} parent=1 // pred_check
      _
    $region19: #{tpu_custom_call.1} parent=1 // pred_check_branch
      %987 = sbr.rel (0) target = $region21
    $region20: #{tpu_custom_call.1} parent=1 // pred_region
      %s989 = ssub.s32 512, 512
      %990 = vsyncadd [#allocation3], %s989
      %s991 = sshll.u32 [#allocation2], 4
      %s992 = int_to_ptr.vmem [resolvable:$true] %s991
      %997 = dma.vmem_to_hbm [thread:$0]  %s992, 512, %s4, [#allocation3], 256, 256, 16
    $region21: #{tpu_custom_call.1} parent=1 // pred_fallthru
      _
    // Predicated region
    $region22: #{tpu_custom_call.1} parent=1 // pred_check
      _
    $region23: #{tpu_custom_call.1} parent=1 // pred_check_branch
      %999 = sbr.rel (0) target = $region25
    $region24: #{tpu_custom_call.1} parent=1 // pred_region
      %1000 = dma.done [#allocation3], 512
    $region25: #{tpu_custom_call.1} parent=1 // pred_fallthru
      _
    %1001 = vsyncpa [#allocation3], 1

</llo_original>
